<compile_context>
chip_gen: v6e
topology: v6e:2x2x1
jax: 0.10.0
libtpu: 0.0.40
codegen_flags: <defaults>
</compile_context>

<pallas_src>
import jax
import jax.numpy as jnp
from jax.experimental import pallas as pl
from jax.experimental.pallas import tpu as pltpu

# ---- problem sizes (small, consistent with the forward pass) ----------------
B = 2          # batch
TV = 16        # number of video frames
TQ = 8         # number of query tokens
DV = 64        # raw video-frame feature dim
DQ = 48        # raw query-token feature dim
H = 32         # shared embedding / backbone hidden dim
OUT = 2        # regression head output (start / end)
T = TV + TQ    # concatenated sequence length

KPAD = 128     # lane width of the weight slab / output (lane-dense stores)

# ---- compact weight-slab row layout (width KPAD, f32) ------------------------
ROW_WV = 0                    # rows [  0,  64) : Wv  in cols [0, H)
ROW_WQ = ROW_WV + DV          # rows [ 64, 112) : Wq  in cols [0, H)
ROW_WB = ROW_WQ + DQ          # rows [112, 144) : Wb  in cols [0, H)
ROW_WH = ROW_WB + H           # rows [144, 176) : Wh  in cols [0, OUT)
ROW_BV = ROW_WH + H           # row 176 : bv
ROW_BQ = ROW_BV + 1           # row 177 : bq
ROW_BB = ROW_BQ + 1           # row 178 : bb
ROW_BH = ROW_BB + 1           # row 179 : bh
SLAB_ROWS = 184               # padded to a sublane (8) multiple


def nlvl_kernel(v_ref, q_ref, w_ref, out_ref):
    """Single invocation: whole problem resident in VMEM.

    v_ref   : (B*TV, DV)   raw video-frame features
    q_ref   : (B*TQ, DQ)   raw query-token features
    w_ref   : (SLAB_ROWS, KPAD) compact fused parameter slab
    out_ref : (B, T, KPAD) lane-dense output (cols [OUT:) are zero)
    """
    # Static, tile-aligned row slices of the compact slab.
    wv = w_ref[ROW_WV:ROW_WV + DV, :]     # (64, 128), live cols [0, H)
    wq = w_ref[ROW_WQ:ROW_WQ + DQ, :]     # (48, 128), live cols [0, H)
    wb = w_ref[ROW_WB:ROW_WB + H, :]      # (32, 128), live cols [0, H)
    wh = w_ref[ROW_WH:ROW_WH + H, :]      # (32, 128), live cols [0, OUT)

    bv = w_ref[ROW_BV:ROW_BV + 1, :]      # (1, 128) bias rows (zero past live cols)
    bq = w_ref[ROW_BQ:ROW_BQ + 1, :]
    bb = w_ref[ROW_BB:ROW_BB + 1, :]
    bh = w_ref[ROW_BH:ROW_BH + 1, :]

    def branch(x, w_embed, b_embed):
        # embed (video or query): Linear(D -> H), lane-padded to 128 cols.
        emb = jnp.dot(x, w_embed, preferred_element_type=jnp.float32) + b_embed
        # backbone: Linear(H -> H) + ReLU.
        hid = jnp.maximum(
            jnp.dot(emb[:, :H], wb, preferred_element_type=jnp.float32) + bb, 0.0)
        # regression head: Linear(H -> OUT), lane-padded to 128 cols.
        return jnp.dot(hid[:, :H], wh, preferred_element_type=jnp.float32) + bh

    v_preds = branch(v_ref[...], wv, bv)  # (B*TV, 128)
    q_preds = branch(q_ref[...], wq, bq)  # (B*TQ, 128)

    # Implicit concat(dim=1): each branch writes its own tile-aligned slice
    # of the sequence axis (TV and TQ are both multiples of 8 -> unmasked).
    out_ref[:, :TV, :] = v_preds.reshape(B, TV, KPAD).astype(out_ref.dtype)
    out_ref[:, TV:, :] = q_preds.reshape(B, TQ, KPAD).astype(out_ref.dtype)


def pack_weights(params):
    """Fuse all 8 parameter tensors into one compact (184, 128) f32 slab.

    Called ONCE at parameter-init time (not in the per-call path).
    """
    wv, bv, wq, bq, wb, bb, wh, bh = params
    slab = jnp.zeros((SLAB_ROWS, KPAD), jnp.float32)
    slab = slab.at[ROW_WV:ROW_WV + DV, :H].set(wv)
    slab = slab.at[ROW_WQ:ROW_WQ + DQ, :H].set(wq)
    slab = slab.at[ROW_WB:ROW_WB + H, :H].set(wb)
    slab = slab.at[ROW_WH:ROW_WH + H, :OUT].set(wh)
    slab = slab.at[ROW_BV, :H].set(bv[0])
    slab = slab.at[ROW_BQ, :H].set(bq[0])
    slab = slab.at[ROW_BB, :H].set(bb[0])
    slab = slab.at[ROW_BH, :OUT].set(bh[0])
    return slab


@jax.jit
def nlvl_forward(video_frames, query_tokens, w_slab):
    # Free (bitcast) reshapes — no data movement, no extra fusion dispatch.
    v2d = video_frames.reshape(B * TV, DV)
    q2d = query_tokens.reshape(B * TQ, DQ)

    out = pl.pallas_call(
        nlvl_kernel,
        out_shape=jax.ShapeDtypeStruct((B, T, KPAD), jnp.float32),
        # Single invocation, no grid: whole arrays VMEM-resident (~150 KiB).
        in_specs=[
            pl.BlockSpec(memory_space=pltpu.MemorySpace.VMEM),   # video (32, 64)
            pl.BlockSpec(memory_space=pltpu.MemorySpace.VMEM),   # query (16, 48)
            pl.BlockSpec(memory_space=pltpu.MemorySpace.VMEM),   # weight slab
        ],
        out_specs=pl.BlockSpec(memory_space=pltpu.MemorySpace.VMEM),
        compiler_params=pltpu.CompilerParams(vmem_limit_bytes=8 * 1024 * 1024),
    )(v2d, q2d, w_slab)

    # Drop the lane padding: single slice, no extra reshape.
    return out[:, :, :OUT]


def reference_forward(video_frames, query_tokens, params):
    wv, bv, wq, bq, wb, bb, wh, bh = params
    v_emb = video_frames @ wv + bv
    q_emb = query_tokens @ wq + bq
    feat = jnp.concatenate([v_emb, q_emb], axis=1)
    hidden = jnp.maximum(feat @ wb + bb, 0.0)
    return hidden @ wh + bh


if __name__ == "__main__":
    key = jax.random.PRNGKey(0)
    k = jax.random.split(key, 10)

    video_frames = jax.random.normal(k[0], (B, TV, DV), dtype=jnp.float32)
    query_tokens = jax.random.normal(k[1], (B, TQ, DQ), dtype=jnp.float32)

    # Deterministic synthetic parameters (synthetic kernel; no checkpoint load).
    wv = 0.02 * jax.random.normal(k[2], (DV, H), dtype=jnp.float32)
    bv = 0.01 * jax.random.normal(k[3], (1, H), dtype=jnp.float32)
    wq = 0.02 * jax.random.normal(k[4], (DQ, H), dtype=jnp.float32)
    bq = 0.01 * jax.random.normal(k[5], (1, H), dtype=jnp.float32)
    wb = 0.02 * jax.random.normal(k[6], (H, H), dtype=jnp.float32)
    bb = 0.01 * jax.random.normal(k[7], (1, H), dtype=jnp.float32)
    wh = 0.02 * jax.random.normal(k[8], (H, OUT), dtype=jnp.float32)
    bh = 0.01 * jax.random.normal(k[9], (1, OUT), dtype=jnp.float32)
    params = (wv, bv, wq, bq, wb, bb, wh, bh)

    # One-time, init-path weight packing (hoisted out of the per-call path).
    w_slab = jax.block_until_ready(pack_weights(params))

    preds = nlvl_forward(video_frames, query_tokens, w_slab)
    preds = jax.block_until_ready(preds)

    ref = reference_forward(video_frames, query_tokens, params)
    assert preds.shape == (B, T, OUT), preds.shape
    assert jnp.allclose(preds, ref, atol=1e-4, rtol=1e-4), "mismatch vs reference"

    print("KERNEL_OK")
</pallas_src>

<mosaic_0001>
module attributes {stable_mosaic.version = 11 : i64} {
  func.func @nlvl_kernel(%arg0: memref<32x64xf32, #tpu.memory_space<vmem>>, %arg1: memref<16x48xf32, #tpu.memory_space<vmem>>, %arg2: memref<184x128xf32, #tpu.memory_space<vmem>>, %arg3: memref<2x24x128xf32, #tpu.memory_space<vmem>>) attributes {dimension_semantics = [], scalar_prefetch = 0 : i64, scratch_operands = 0 : i64, tpu.core_type = #tpu.core_type<tc>} {
    %c0 = arith.constant 0 : index
    %c0_0 = arith.constant 0 : index
    %0 = vector.load %arg2[%c0, %c0_0] : memref<184x128xf32, #tpu.memory_space<vmem>>, vector<64x128xf32>
    %c64 = arith.constant 64 : index
    %c0_1 = arith.constant 0 : index
    %1 = vector.load %arg2[%c64, %c0_1] : memref<184x128xf32, #tpu.memory_space<vmem>>, vector<48x128xf32>
    %c112 = arith.constant 112 : index
    %c0_2 = arith.constant 0 : index
    %2 = vector.load %arg2[%c112, %c0_2] : memref<184x128xf32, #tpu.memory_space<vmem>>, vector<32x128xf32>
    %c144 = arith.constant 144 : index
    %c0_3 = arith.constant 0 : index
    %3 = vector.load %arg2[%c144, %c0_3] : memref<184x128xf32, #tpu.memory_space<vmem>>, vector<32x128xf32>
    %c176 = arith.constant 176 : index
    %c0_4 = arith.constant 0 : index
    %4 = vector.load %arg2[%c176, %c0_4] : memref<184x128xf32, #tpu.memory_space<vmem>>, vector<1x128xf32>
    %c177 = arith.constant 177 : index
    %c0_5 = arith.constant 0 : index
    %5 = vector.load %arg2[%c177, %c0_5] : memref<184x128xf32, #tpu.memory_space<vmem>>, vector<1x128xf32>
    %c178 = arith.constant 178 : index
    %c0_6 = arith.constant 0 : index
    %6 = vector.load %arg2[%c178, %c0_6] : memref<184x128xf32, #tpu.memory_space<vmem>>, vector<1x128xf32>
    %c179 = arith.constant 179 : index
    %c0_7 = arith.constant 0 : index
    %7 = vector.load %arg2[%c179, %c0_7] : memref<184x128xf32, #tpu.memory_space<vmem>>, vector<1x128xf32>
    %c0_8 = arith.constant 0 : index
    %c0_9 = arith.constant 0 : index
    %8 = vector.load %arg0[%c0_8, %c0_9] : memref<32x64xf32, #tpu.memory_space<vmem>>, vector<32x64xf32>
    %cst = arith.constant dense<0.000000e+00> : vector<32x128xf32>
    %9 = tpu.matmul %8, %0, %cst {dimension_numbers = #tpu.dot_dimension_numbers<[1], [0], [0], [1], [0, 0, 1, 1], [], []>} : vector<32x64xf32>, vector<64x128xf32>, vector<32x128xf32> -> vector<32x128xf32>
    %10 = vector.broadcast %4 : vector<1x128xf32> to vector<32x128xf32>
    %11 = arith.addf %9, %10 : vector<32x128xf32>
    %12 = vector.extract_strided_slice %11 {offsets = [0, 0], sizes = [32, 32], strides = [1, 1]} : vector<32x128xf32> to vector<32x32xf32>
    %cst_10 = arith.constant dense<0.000000e+00> : vector<32x128xf32>
    %13 = tpu.matmul %12, %2, %cst_10 {dimension_numbers = #tpu.dot_dimension_numbers<[1], [0], [0], [1], [0, 0, 1, 1], [], []>} : vector<32x32xf32>, vector<32x128xf32>, vector<32x128xf32> -> vector<32x128xf32>
    %14 = vector.broadcast %6 : vector<1x128xf32> to vector<32x128xf32>
    %15 = arith.addf %13, %14 : vector<32x128xf32>
    %cst_11 = arith.constant 0.000000e+00 : f32
    %16 = vector.broadcast %cst_11 : f32 to vector<32x128xf32>
    %17 = arith.maximumf %15, %16 : vector<32x128xf32>
    %18 = vector.extract_strided_slice %17 {offsets = [0, 0], sizes = [32, 32], strides = [1, 1]} : vector<32x128xf32> to vector<32x32xf32>
    %cst_12 = arith.constant dense<0.000000e+00> : vector<32x128xf32>
    %19 = tpu.matmul %18, %3, %cst_12 {dimension_numbers = #tpu.dot_dimension_numbers<[1], [0], [0], [1], [0, 0, 1, 1], [], []>} : vector<32x32xf32>, vector<32x128xf32>, vector<32x128xf32> -> vector<32x128xf32>
    %20 = vector.broadcast %7 : vector<1x128xf32> to vector<32x128xf32>
    %21 = arith.addf %19, %20 : vector<32x128xf32>
    %c0_13 = arith.constant 0 : index
    %c0_14 = arith.constant 0 : index
    %22 = vector.load %arg1[%c0_13, %c0_14] : memref<16x48xf32, #tpu.memory_space<vmem>>, vector<16x48xf32>
    %cst_15 = arith.constant dense<0.000000e+00> : vector<16x128xf32>
    %23 = tpu.matmul %22, %1, %cst_15 {dimension_numbers = #tpu.dot_dimension_numbers<[1], [0], [0], [1], [0, 0, 1, 1], [], []>} : vector<16x48xf32>, vector<48x128xf32>, vector<16x128xf32> -> vector<16x128xf32>
    %24 = vector.broadcast %5 : vector<1x128xf32> to vector<16x128xf32>
    %25 = arith.addf %23, %24 : vector<16x128xf32>
    %26 = vector.extract_strided_slice %25 {offsets = [0, 0], sizes = [16, 32], strides = [1, 1]} : vector<16x128xf32> to vector<16x32xf32>
    %cst_16 = arith.constant dense<0.000000e+00> : vector<16x128xf32>
    %27 = tpu.matmul %26, %2, %cst_16 {dimension_numbers = #tpu.dot_dimension_numbers<[1], [0], [0], [1], [0, 0, 1, 1], [], []>} : vector<16x32xf32>, vector<32x128xf32>, vector<16x128xf32> -> vector<16x128xf32>
    %28 = vector.broadcast %6 : vector<1x128xf32> to vector<16x128xf32>
    %29 = arith.addf %27, %28 : vector<16x128xf32>
    %cst_17 = arith.constant 0.000000e+00 : f32
    %30 = vector.broadcast %cst_17 : f32 to vector<16x128xf32>
    %31 = arith.maximumf %29, %30 : vector<16x128xf32>
    %32 = vector.extract_strided_slice %31 {offsets = [0, 0], sizes = [16, 32], strides = [1, 1]} : vector<16x128xf32> to vector<16x32xf32>
    %cst_18 = arith.constant dense<0.000000e+00> : vector<16x128xf32>
    %33 = tpu.matmul %32, %3, %cst_18 {dimension_numbers = #tpu.dot_dimension_numbers<[1], [0], [0], [1], [0, 0, 1, 1], [], []>} : vector<16x32xf32>, vector<32x128xf32>, vector<16x128xf32> -> vector<16x128xf32>
    %34 = vector.broadcast %7 : vector<1x128xf32> to vector<16x128xf32>
    %35 = arith.addf %33, %34 : vector<16x128xf32>
    %36 = vector.shape_cast %21 : vector<32x128xf32> to vector<2x16x128xf32>
    %c0_19 = arith.constant 0 : index
    %c0_20 = arith.constant 0 : index
    %c0_21 = arith.constant 0 : index
    %37 = vector.load %arg3[%c0_19, %c0_20, %c0_21] : memref<2x24x128xf32, #tpu.memory_space<vmem>>, vector<2x16x128xf32>
    tpu.vector_store %arg3[%c0_19, %c0_20, %c0_21], %36 {strides = array<i32>} : memref<2x24x128xf32, #tpu.memory_space<vmem>>, vector<2x16x128xf32>,
    %38 = vector.shape_cast %35 : vector<16x128xf32> to vector<2x8x128xf32>
    %c0_22 = arith.constant 0 : index
    %c16 = arith.constant 16 : index
    %c0_23 = arith.constant 0 : index
    %39 = vector.load %arg3[%c0_22, %c16, %c0_23] : memref<2x24x128xf32, #tpu.memory_space<vmem>>, vector<2x8x128xf32>
    tpu.vector_store %arg3[%c0_22, %c16, %c0_23], %38 {strides = array<i32>} : memref<2x24x128xf32, #tpu.memory_space<vmem>>, vector<2x8x128xf32>,
    return
  }
}

</mosaic_0001>

<llo_original>
// kernel: nlvl_forward.1
$region0: #{nlvl_forward.1}
  #allocation0 [shape = 'u32[]', space=smem, size = 0x4, offset = 0x4, fixed_abs, tag = 'smem constant byte address 0x4 - core index']
  #allocation1 [shape = 'u32[144,128]{1,0:T(1,128)}', space=vmem, size = 0x12000, scoped, tag = 'internal scratch']
  %s0 = inlined_call_operand.hbm [shape: f32[32,64], index: 0, kind: input, shape index: {}]
  %s1 = inlined_call_operand.hbm [shape: f32[16,48], index: 1, kind: input, shape index: {}]
  %s2 = inlined_call_operand.hbm [shape: f32[184,128], index: 2, kind: input, shape index: {}]
  %s3 = inlined_call_operand.vmem [shape: f32[2,24,128], index: 3, kind: output, shape index: {}]
  %s4 = sld [smem:[#allocation0]]
  $region34: #{nlvl_forward.1} parent=0
    _
  %s6 = ssub.s32 1, %s4
  %s7 = scalar_select 0, %s6, %s4
  $region1: #{nlvl_forward.1} parent=0
    #allocation2 [shape = 'u8[16384]{0}', space=vmem, size = 0x4000, scoped, tag = 'input window, operand 0, single buffered']
    #allocation3 [shape = 's32[1]{0}', space=sflag, size = 0x4, scoped, tag = 'scoped memory for nlvl_forward.1']
    #allocation4 [shape = 'u8[8192]{0}', space=vmem, size = 0x2000, scoped, tag = 'input window, operand 1, single buffered']
    #allocation5 [shape = 's32[1]{0}', space=sflag, size = 0x4, scoped, tag = 'scoped memory for nlvl_forward.1']
    #allocation6 [shape = 'u8[94208]{0}', space=vmem, size = 0x17000, scoped, tag = 'input window, operand 2, single buffered']
    %8 = vsyncpa [#allocation3], 0
    %9 = vsyncpa [#allocation5], 0
    // Predicated region
    $region2: #{nlvl_forward.1} parent=1 // pred_check
      _
    $region3: #{nlvl_forward.1} parent=1 // pred_check_branch
      %11 = sbr.rel (0) target = $region5
    $region4: #{nlvl_forward.1} parent=1 // pred_region
      %s13 = ssub.s32 512, 512
      %14 = vsyncadd [#allocation3], %s13
      %s15 = sshll.u32 [#allocation2], 4
      %s16 = int_to_ptr.vmem [resolvable:$true] %s15
      %21 = dma.hbm_to_vmem [thread:$0]  %s0, 512, %s16, [#allocation3], 128, 128, 8
    $region5: #{nlvl_forward.1} parent=1 // pred_fallthru
      _
    // Predicated region
    $region6: #{nlvl_forward.1} parent=1 // pred_check
      _
    $region7: #{nlvl_forward.1} parent=1 // pred_check_branch
      %23 = sbr.rel (0) target = $region9
    $region8: #{nlvl_forward.1} parent=1 // pred_region
      %s25 = ssub.s32 256, 256
      %26 = vsyncadd [#allocation5], %s25
      %s27 = sshll.u32 [#allocation4], 4
      %s28 = int_to_ptr.vmem [resolvable:$true] %s27
      %33 = dma.hbm_to_vmem [thread:$0]  %s1, 256, %s28, [#allocation5], 128, 128, 8
    $region9: #{nlvl_forward.1} parent=1 // pred_fallthru
      _
    // Predicated region
    $region10: #{nlvl_forward.1} parent=1 // pred_check
      _
    $region11: #{nlvl_forward.1} parent=1 // pred_check_branch
      %35 = sbr.rel (0) target = $region13
    $region12: #{nlvl_forward.1} parent=1 // pred_region
      %s37 = ssub.s32 2944, 2944
      %38 = vsyncadd [#allocation5], %s37
      %s39 = sshll.u32 [#allocation6], 4
      %s40 = int_to_ptr.vmem [resolvable:$true] %s39
      %45 = dma.hbm_to_vmem [thread:$0]  %s2, 2944, %s40, [#allocation5], 128, 128, 8
    $region13: #{nlvl_forward.1} parent=1 // pred_fallthru
      _
    // Predicated region
    $region14: #{nlvl_forward.1} parent=1 // pred_check
      _
    $region15: #{nlvl_forward.1} parent=1 // pred_check_branch
      %47 = sbr.rel (0) target = $region17
    $region16: #{nlvl_forward.1} parent=1 // pred_region
      %48 = dma.done [#allocation3], 512
    $region17: #{nlvl_forward.1} parent=1 // pred_fallthru
      _
    // Predicated region
    $region18: #{nlvl_forward.1} parent=1 // pred_check
      _
    $region19: #{nlvl_forward.1} parent=1 // pred_check_branch
      %50 = sbr.rel (0) target = $region21
    $region20: #{nlvl_forward.1} parent=1 // pred_region
      %51 = dma.done [#allocation5], 256
    $region21: #{nlvl_forward.1} parent=1 // pred_fallthru
      _
    // Predicated region
    $region22: #{nlvl_forward.1} parent=1 // pred_check
      _
    $region23: #{nlvl_forward.1} parent=1 // pred_check_branch
      %53 = sbr.rel (0) target = $region25
    $region24: #{nlvl_forward.1} parent=1 // pred_region
      %54 = dma.done [#allocation5], 2944
    $region25: #{nlvl_forward.1} parent=1 // pred_fallthru
      _
    %v55 = vld [vmem:[#allocation6] sm:$0xff]
    %v56 = vld [vmem:[#allocation6 + $0x8] sm:$0xff]
    %v57 = vld [vmem:[#allocation6 + $0x10] sm:$0xff]
    %v58 = vld [vmem:[#allocation6 + $0x18] sm:$0xff]
    %v59 = vld [vmem:[#allocation6 + $0x20] sm:$0xff]
    %v60 = vld [vmem:[#allocation6 + $0x28] sm:$0xff]
    %v61 = vld [vmem:[#allocation6 + $0x30] sm:$0xff]
    %v62 = vld [vmem:[#allocation6 + $0x38] sm:$0xff]
    %v63 = vld [vmem:[#allocation6 + $0x40] sm:$0xff]
    %v64 = vld [vmem:[#allocation6 + $0x48] sm:$0xff]
    %v65 = vld [vmem:[#allocation6 + $0x50] sm:$0xff]
    %v66 = vld [vmem:[#allocation6 + $0x58] sm:$0xff]
    %v67 = vld [vmem:[#allocation6 + $0x60] sm:$0xff]
    %v68 = vld [vmem:[#allocation6 + $0x68] sm:$0xff]
    %v69 = vld [vmem:[#allocation6 + $0x70] sm:$0xff]
    %v70 = vld [vmem:[#allocation6 + $0x78] sm:$0xff]
    %v71 = vld [vmem:[#allocation6 + $0x80] sm:$0xff]
    %v72 = vld [vmem:[#allocation6 + $0x88] sm:$0xff]
    %v73 = vld [vmem:[#allocation6 + $0x90] sm:$0xff]
    %v74 = vld [vmem:[#allocation6 + $0x98] sm:$0xff]
    %v75 = vld [vmem:[#allocation6 + $0xa0] sm:$0xff]
    %v76 = vld [vmem:[#allocation6 + $0xa8] sm:$0xff]
    %v77 = vld [vmem:[#allocation6 + $0xb0] sm:$0x1]
    %v78 = vld [vmem:[#allocation6 + $0xb1] sm:$0x1]
    %v79 = vld [vmem:[#allocation6 + $0xb2] sm:$0x1]
    %v80 = vld [vmem:[#allocation6 + $0xb3] sm:$0x1]
    %v81 = vld [vmem:[#allocation2] sm:$0xff]
    %v82 = vld [vmem:[#allocation2 + $0x8] sm:$0xff]
    %v83 = vld [vmem:[#allocation2 + $0x10] sm:$0xff]
    %v84 = vld [vmem:[#allocation2 + $0x18] sm:$0xff]
    %v85 = vlaneseq
    %v86 = vshrl.u32 %v85, 7
    %v87 = vsub.s32 0, %v86
    %v88 = vrot.slane %v77, %v87
    %vm89 = vcmask 523264
    %v91 = vsel %vm89, %v81, 0
    %v94 = vsel %vm89, %v82, 0
    %v97 = vsel %vm89, %v83, 0
    %v100 = vsel %vm89, %v84, 0
    %102 = vmatprep.subr.mxu0 0.0
    %103 = vmatpush1.msra.mxu0 0.0
    %104 = vmatprep.subr.mxu0 0.0
    %105 = vmatpush1.msra.mxu0 0.0
    %106 = vmatprep.subr.mxu0 0.0
    %107 = vmatpush1.msra.mxu0 0.0
    %108 = vmatprep.subr.mxu0 0.0
    %109 = vmatpush1.msra.mxu0 0.0
    %110 = vmatprep.subr.mxu0 0.0
    %111 = vmatpush1.msra.mxu0 0.0
    %112 = vmatprep.subr.mxu0 0.0
    %113 = vmatpush1.msra.mxu0 0.0
    %114 = vmatprep.subr.mxu0 0.0
    %115 = vmatpush1.msra.mxu0 0.0
    %116 = vmatprep.subr.mxu0 0.0
    %117 = vmatpush1.msra.mxu0 0.0
    %118 = vmatprep.subr.mxu0 0.0
    %119 = vmatpush1.msra.mxu0 %v62
    %120 = vmatprep.subr.mxu0 0.0
    %121 = vmatpush1.msra.mxu0 %v61
    %122 = vmatprep.subr.mxu0 0.0
    %123 = vmatpush1.msra.mxu0 %v60
    %124 = vmatprep.subr.mxu0 0.0
    %125 = vmatpush1.msra.mxu0 %v59
    %126 = vmatprep.subr.mxu0 0.0
    %127 = vmatpush1.msra.mxu0 %v58
    %128 = vmatprep.subr.mxu0 0.0
    %129 = vmatpush1.msra.mxu0 %v57
    %130 = vmatprep.subr.mxu0 0.0
    %131 = vmatpush1.msra.mxu0 %v56
    %132 = vmatprep.subr.mxu0 0.0
    %133 = vmatpush1.msra.mxu0 %v55
    %134 = vmatprep.subr.mxu0 0.0
    %135 = vmatpush2.msra.mxu0 0.0
    %136 = vmatprep.subr.mxu0 0.0
    %137 = vmatpush2.msra.mxu0 0.0
    %138 = vmatprep.subr.mxu0 0.0
    %139 = vmatpush2.msra.mxu0 0.0
    %140 = vmatprep.subr.mxu0 0.0
    %141 = vmatpush2.msra.mxu0 0.0
    %142 = vmatprep.subr.mxu0 0.0
    %143 = vmatpush2.msra.mxu0 0.0
    %144 = vmatprep.subr.mxu0 0.0
    %145 = vmatpush2.msra.mxu0 0.0
    %146 = vmatprep.subr.mxu0 0.0
    %147 = vmatpush2.msra.mxu0 0.0
    %148 = vmatprep.subr.mxu0 0.0
    %149 = vmatpush2.msra.mxu0 0.0
    %150 = vmatprep.subr.mxu0 0.0
    %151 = vmatpush2.msra.mxu0 0.0
    %152 = vmatprep.subr.mxu0 0.0
    %153 = vmatpush2.msra.mxu0 0.0
    %154 = vmatprep.subr.mxu0 0.0
    %155 = vmatpush2.msra.mxu0 0.0
    %156 = vmatprep.subr.mxu0 0.0
    %157 = vmatpush2.msra.mxu0 0.0
    %158 = vmatprep.subr.mxu0 0.0
    %159 = vmatpush2.msra.mxu0 0.0
    %160 = vmatprep.subr.mxu0 0.0
    %161 = vmatpush2.msra.mxu0 0.0
    %162 = vmatprep.subr.mxu0 0.0
    %163 = vmatpush2.msra.mxu0 0.0
    %164 = vmatprep.subr.mxu0 0.0
    %165 = vmatpush2.msra.mxu0 0.0
    %166 = vmatprep.mubr.f32.mxu0 0.0
    %167 = vmatmul.mubr.f32.gmra.mxu0 %v91
    %v168 = vpop.f32.mrf.mxu0
    %v169 = vadd.f32 %v88, %v168
    %v170 = vpop.f32.mrf.mxu0
    %171 = vmatprep.mubr.f32.mxu0 0.0
    %172 = vmatmul.mubr.f32.gmra.mxu0 %v94
    %v173 = vpop.f32.mrf.mxu0
    %v174 = vadd.f32 %v88, %v173
    %v175 = vpop.f32.mrf.mxu0
    %176 = vmatprep.mubr.f32.mxu0 0.0
    %177 = vmatmul.mubr.f32.gmra.mxu0 %v97
    %v178 = vpop.f32.mrf.mxu0
    %v179 = vadd.f32 %v88, %v178
    %v180 = vpop.f32.mrf.mxu0
    %181 = vmatprep.mubr.f32.mxu0 0.0
    %182 = vmatmul.mubr.f32.gmra.mxu0 %v100
    %v183 = vpop.f32.mrf.mxu0
    %v184 = vadd.f32 %v88, %v183
    %v185 = vpop.f32.mrf.mxu0
    %186 = vdwg.mxu0
    %v187 = vlaneseq
    %v188 = vshrl.u32 %v187, 7
    %v189 = vsub.s32 0, %v188
    %v190 = vrot.slane %v79, %v189
    %vm191 = vcmask 261120
    %v193 = vsel %vm191, %v169, 0
    %v196 = vsel %vm191, %v174, 0
    %v199 = vsel %vm191, %v179, 0
    %v202 = vsel %vm191, %v184, 0
    %204 = vmatprep.subr.mxu0 0.0
    %205 = vmatpush1.msra.mxu0 0.0
    %206 = vmatprep.subr.mxu0 0.0
    %207 = vmatpush1.msra.mxu0 0.0
    %208 = vmatprep.subr.mxu0 0.0
    %209 = vmatpush1.msra.mxu0 0.0
    %210 = vmatprep.subr.mxu0 0.0
    %211 = vmatpush1.msra.mxu0 0.0
    %212 = vmatprep.subr.mxu0 0.0
    %213 = vmatpush1.msra.mxu0 0.0
    %214 = vmatprep.subr.mxu0 0.0
    %215 = vmatpush1.msra.mxu0 0.0
    %216 = vmatprep.subr.mxu0 0.0
    %217 = vmatpush1.msra.mxu0 0.0
    %218 = vmatprep.subr.mxu0 0.0
    %219 = vmatpush1.msra.mxu0 0.0
    %220 = vmatprep.subr.mxu0 0.0
    %221 = vmatpush1.msra.mxu0 0.0
    %222 = vmatprep.subr.mxu0 0.0
    %223 = vmatpush1.msra.mxu0 0.0
    %224 = vmatprep.subr.mxu0 0.0
    %225 = vmatpush1.msra.mxu0 0.0
    %226 = vmatprep.subr.mxu0 0.0
    %227 = vmatpush1.msra.mxu0 0.0
    %228 = vmatprep.subr.mxu0 0.0
    %229 = vmatpush1.msra.mxu0 %v72
    %230 = vmatprep.subr.mxu0 0.0
    %231 = vmatpush1.msra.mxu0 %v71
    %232 = vmatprep.subr.mxu0 0.0
    %233 = vmatpush1.msra.mxu0 %v70
    %234 = vmatprep.subr.mxu0 0.0
    %235 = vmatpush1.msra.mxu0 %v69
    %236 = vmatprep.subr.mxu0 0.0
    %237 = vmatpush2.msra.mxu0 0.0
    %238 = vmatprep.subr.mxu0 0.0
    %239 = vmatpush2.msra.mxu0 0.0
    %240 = vmatprep.subr.mxu0 0.0
    %241 = vmatpush2.msra.mxu0 0.0
    %242 = vmatprep.subr.mxu0 0.0
    %243 = vmatpush2.msra.mxu0 0.0
    %244 = vmatprep.subr.mxu0 0.0
    %245 = vmatpush2.msra.mxu0 0.0
    %246 = vmatprep.subr.mxu0 0.0
    %247 = vmatpush2.msra.mxu0 0.0
    %248 = vmatprep.subr.mxu0 0.0
    %249 = vmatpush2.msra.mxu0 0.0
    %250 = vmatprep.subr.mxu0 0.0
    %251 = vmatpush2.msra.mxu0 0.0
    %252 = vmatprep.subr.mxu0 0.0
    %253 = vmatpush2.msra.mxu0 0.0
    %254 = vmatprep.subr.mxu0 0.0
    %255 = vmatpush2.msra.mxu0 0.0
    %256 = vmatprep.subr.mxu0 0.0
    %257 = vmatpush2.msra.mxu0 0.0
    %258 = vmatprep.subr.mxu0 0.0
    %259 = vmatpush2.msra.mxu0 0.0
    %260 = vmatprep.subr.mxu0 0.0
    %261 = vmatpush2.msra.mxu0 0.0
    %262 = vmatprep.subr.mxu0 0.0
    %263 = vmatpush2.msra.mxu0 0.0
    %264 = vmatprep.subr.mxu0 0.0
    %265 = vmatpush2.msra.mxu0 0.0
    %266 = vmatprep.subr.mxu0 0.0
    %267 = vmatpush2.msra.mxu0 0.0
    %268 = vmatprep.mubr.f32.mxu0 0.0
    %269 = vmatmul.mubr.f32.gmra.mxu0 %v193
    %v270 = vpop.f32.mrf.mxu0
    %v271 = vadd.f32 %v190, %v270
    %v272 = vpop.f32.mrf.mxu0
    %273 = vmatprep.mubr.f32.mxu0 0.0
    %274 = vmatmul.mubr.f32.gmra.mxu0 %v196
    %v275 = vpop.f32.mrf.mxu0
    %v276 = vadd.f32 %v190, %v275
    %v277 = vpop.f32.mrf.mxu0
    %278 = vmatprep.mubr.f32.mxu0 0.0
    %279 = vmatmul.mubr.f32.gmra.mxu0 %v199
    %v280 = vpop.f32.mrf.mxu0
    %v281 = vadd.f32 %v190, %v280
    %v282 = vpop.f32.mrf.mxu0
    %283 = vmatprep.mubr.f32.mxu0 0.0
    %284 = vmatmul.mubr.f32.gmra.mxu0 %v202
    %v285 = vpop.f32.mrf.mxu0
    %v286 = vadd.f32 %v190, %v285
    %v287 = vpop.f32.mrf.mxu0
    %288 = vdwg.mxu0
    %v289 = vmax.f32 %v271, 0.0
    %v290 = vmax.f32 %v276, 0.0
    %v291 = vmax.f32 %v281, 0.0
    %v292 = vmax.f32 %v286, 0.0
    %v293 = vlaneseq
    %v294 = vshrl.u32 %v293, 7
    %v295 = vsub.s32 0, %v294
    %v296 = vrot.slane %v80, %v295
    %v298 = vsel %vm191, %v289, 0
    %v301 = vsel %vm191, %v290, 0
    %v304 = vsel %vm191, %v291, 0
    %v307 = vsel %vm191, %v292, 0
    %309 = vmatprep.subr.mxu0 0.0
    %310 = vmatpush1.msra.mxu0 0.0
    %311 = vmatprep.subr.mxu0 0.0
    %312 = vmatpush1.msra.mxu0 0.0
    %313 = vmatprep.subr.mxu0 0.0
    %314 = vmatpush1.msra.mxu0 0.0
    %315 = vmatprep.subr.mxu0 0.0
    %316 = vmatpush1.msra.mxu0 0.0
    %317 = vmatprep.subr.mxu0 0.0
    %318 = vmatpush1.msra.mxu0 0.0
    %319 = vmatprep.subr.mxu0 0.0
    %320 = vmatpush1.msra.mxu0 0.0
    %321 = vmatprep.subr.mxu0 0.0
    %322 = vmatpush1.msra.mxu0 0.0
    %323 = vmatprep.subr.mxu0 0.0
    %324 = vmatpush1.msra.mxu0 0.0
    %325 = vmatprep.subr.mxu0 0.0
    %326 = vmatpush1.msra.mxu0 0.0
    %327 = vmatprep.subr.mxu0 0.0
    %328 = vmatpush1.msra.mxu0 0.0
    %329 = vmatprep.subr.mxu0 0.0
    %330 = vmatpush1.msra.mxu0 0.0
    %331 = vmatprep.subr.mxu0 0.0
    %332 = vmatpush1.msra.mxu0 0.0
    %333 = vmatprep.subr.mxu0 0.0
    %334 = vmatpush1.msra.mxu0 %v76
    %335 = vmatprep.subr.mxu0 0.0
    %336 = vmatpush1.msra.mxu0 %v75
    %337 = vmatprep.subr.mxu0 0.0
    %338 = vmatpush1.msra.mxu0 %v74
    %339 = vmatprep.subr.mxu0 0.0
    %340 = vmatpush1.msra.mxu0 %v73
    %341 = vmatprep.subr.mxu0 0.0
    %342 = vmatpush2.msra.mxu0 0.0
    %343 = vmatprep.subr.mxu0 0.0
    %344 = vmatpush2.msra.mxu0 0.0
    %345 = vmatprep.subr.mxu0 0.0
    %346 = vmatpush2.msra.mxu0 0.0
    %347 = vmatprep.subr.mxu0 0.0
    %348 = vmatpush2.msra.mxu0 0.0
    %349 = vmatprep.subr.mxu0 0.0
    %350 = vmatpush2.msra.mxu0 0.0
    %351 = vmatprep.subr.mxu0 0.0
    %352 = vmatpush2.msra.mxu0 0.0
    %353 = vmatprep.subr.mxu0 0.0
    %354 = vmatpush2.msra.mxu0 0.0
    %355 = vmatprep.subr.mxu0 0.0
    %356 = vmatpush2.msra.mxu0 0.0
    %357 = vmatprep.subr.mxu0 0.0
    %358 = vmatpush2.msra.mxu0 0.0
    %359 = vmatprep.subr.mxu0 0.0
    %360 = vmatpush2.msra.mxu0 0.0
    %361 = vmatprep.subr.mxu0 0.0
    %362 = vmatpush2.msra.mxu0 0.0
    %363 = vmatprep.subr.mxu0 0.0
    %364 = vmatpush2.msra.mxu0 0.0
    %365 = vmatprep.subr.mxu0 0.0
    %366 = vmatpush2.msra.mxu0 0.0
    %367 = vmatprep.subr.mxu0 0.0
    %368 = vmatpush2.msra.mxu0 0.0
    %369 = vmatprep.subr.mxu0 0.0
    %370 = vmatpush2.msra.mxu0 0.0
    %371 = vmatprep.subr.mxu0 0.0
    %372 = vmatpush2.msra.mxu0 0.0
    %373 = vmatprep.mubr.f32.mxu0 0.0
    %374 = vmatmul.mubr.f32.gmra.mxu0 %v298
    %v375 = vpop.f32.mrf.mxu0
    %v376 = vadd.f32 %v296, %v375
    %v377 = vpop.f32.mrf.mxu0
    %378 = vmatprep.mubr.f32.mxu0 0.0
    %379 = vmatmul.mubr.f32.gmra.mxu0 %v301
    %v380 = vpop.f32.mrf.mxu0
    %v381 = vadd.f32 %v296, %v380
    %v382 = vpop.f32.mrf.mxu0
    %383 = vmatprep.mubr.f32.mxu0 0.0
    %384 = vmatmul.mubr.f32.gmra.mxu0 %v304
    %v385 = vpop.f32.mrf.mxu0
    %v386 = vadd.f32 %v296, %v385
    %v387 = vpop.f32.mrf.mxu0
    %388 = vmatprep.mubr.f32.mxu0 0.0
    %389 = vmatmul.mubr.f32.gmra.mxu0 %v307
    %v390 = vpop.f32.mrf.mxu0
    %v391 = vadd.f32 %v296, %v390
    %v392 = vpop.f32.mrf.mxu0
    %393 = vdwg.mxu0
    %v394 = vld [vmem:[#allocation4] sm:$0xff]
    %v395 = vld [vmem:[#allocation4 + $0x8] sm:$0xff]
    %v396 = vlaneseq
    %v397 = vshrl.u32 %v396, 7
    %v398 = vsub.s32 0, %v397
    %v399 = vrot.slane %v78, %v398
    %vm400 = vcmask 392192
    %v402 = vsel %vm400, %v394, 0
    %v405 = vsel %vm400, %v395, 0
    %407 = vmatprep.subr.mxu0 0.0
    %408 = vmatpush1.msra.mxu0 0.0
    %409 = vmatprep.subr.mxu0 0.0
    %410 = vmatpush1.msra.mxu0 0.0
    %411 = vmatprep.subr.mxu0 0.0
    %412 = vmatpush1.msra.mxu0 0.0
    %413 = vmatprep.subr.mxu0 0.0
    %414 = vmatpush1.msra.mxu0 0.0
    %415 = vmatprep.subr.mxu0 0.0
    %416 = vmatpush1.msra.mxu0 0.0
    %417 = vmatprep.subr.mxu0 0.0
    %418 = vmatpush1.msra.mxu0 0.0
    %419 = vmatprep.subr.mxu0 0.0
    %420 = vmatpush1.msra.mxu0 0.0
    %421 = vmatprep.subr.mxu0 0.0
    %422 = vmatpush1.msra.mxu0 0.0
    %423 = vmatprep.subr.mxu0 0.0
    %424 = vmatpush1.msra.mxu0 0.0
    %425 = vmatprep.subr.mxu0 0.0
    %426 = vmatpush1.msra.mxu0 0.0
    %427 = vmatprep.subr.mxu0 0.0
    %428 = vmatpush1.msra.mxu0 %v68
    %429 = vmatprep.subr.mxu0 0.0
    %430 = vmatpush1.msra.mxu0 %v67
    %431 = vmatprep.subr.mxu0 0.0
    %432 = vmatpush1.msra.mxu0 %v66
    %433 = vmatprep.subr.mxu0 0.0
    %434 = vmatpush1.msra.mxu0 %v65
    %435 = vmatprep.subr.mxu0 0.0
    %436 = vmatpush1.msra.mxu0 %v64
    %437 = vmatprep.subr.mxu0 0.0
    %438 = vmatpush1.msra.mxu0 %v63
    %439 = vmatprep.subr.mxu0 0.0
    %440 = vmatpush2.msra.mxu0 0.0
    %441 = vmatprep.subr.mxu0 0.0
    %442 = vmatpush2.msra.mxu0 0.0
    %443 = vmatprep.subr.mxu0 0.0
    %444 = vmatpush2.msra.mxu0 0.0
    %445 = vmatprep.subr.mxu0 0.0
    %446 = vmatpush2.msra.mxu0 0.0
    %447 = vmatprep.subr.mxu0 0.0
    %448 = vmatpush2.msra.mxu0 0.0
    %449 = vmatprep.subr.mxu0 0.0
    %450 = vmatpush2.msra.mxu0 0.0
    %451 = vmatprep.subr.mxu0 0.0
    %452 = vmatpush2.msra.mxu0 0.0
    %453 = vmatprep.subr.mxu0 0.0
    %454 = vmatpush2.msra.mxu0 0.0
    %455 = vmatprep.subr.mxu0 0.0
    %456 = vmatpush2.msra.mxu0 0.0
    %457 = vmatprep.subr.mxu0 0.0
    %458 = vmatpush2.msra.mxu0 0.0
    %459 = vmatprep.subr.mxu0 0.0
    %460 = vmatpush2.msra.mxu0 0.0
    %461 = vmatprep.subr.mxu0 0.0
    %462 = vmatpush2.msra.mxu0 0.0
    %463 = vmatprep.subr.mxu0 0.0
    %464 = vmatpush2.msra.mxu0 0.0
    %465 = vmatprep.subr.mxu0 0.0
    %466 = vmatpush2.msra.mxu0 0.0
    %467 = vmatprep.subr.mxu0 0.0
    %468 = vmatpush2.msra.mxu0 0.0
    %469 = vmatprep.subr.mxu0 0.0
    %470 = vmatpush2.msra.mxu0 0.0
    %471 = vmatprep.mubr.f32.mxu0 0.0
    %472 = vmatmul.mubr.f32.gmra.mxu0 %v402
    %v473 = vpop.f32.mrf.mxu0
    %v474 = vadd.f32 %v399, %v473
    %v475 = vpop.f32.mrf.mxu0
    %476 = vmatprep.mubr.f32.mxu0 0.0
    %477 = vmatmul.mubr.f32.gmra.mxu0 %v405
    %v478 = vpop.f32.mrf.mxu0
    %v479 = vadd.f32 %v399, %v478
    %v480 = vpop.f32.mrf.mxu0
    %481 = vdwg.mxu0
    %v483 = vsel %vm191, %v474, 0
    %v486 = vsel %vm191, %v479, 0
    %488 = vmatprep.subr.mxu0 0.0
    %489 = vmatpush1.msra.mxu0 0.0
    %490 = vmatprep.subr.mxu0 0.0
    %491 = vmatpush1.msra.mxu0 0.0
    %492 = vmatprep.subr.mxu0 0.0
    %493 = vmatpush1.msra.mxu0 0.0
    %494 = vmatprep.subr.mxu0 0.0
    %495 = vmatpush1.msra.mxu0 0.0
    %496 = vmatprep.subr.mxu0 0.0
    %497 = vmatpush1.msra.mxu0 0.0
    %498 = vmatprep.subr.mxu0 0.0
    %499 = vmatpush1.msra.mxu0 0.0
    %500 = vmatprep.subr.mxu0 0.0
    %501 = vmatpush1.msra.mxu0 0.0
    %502 = vmatprep.subr.mxu0 0.0
    %503 = vmatpush1.msra.mxu0 0.0
    %504 = vmatprep.subr.mxu0 0.0
    %505 = vmatpush1.msra.mxu0 0.0
    %506 = vmatprep.subr.mxu0 0.0
    %507 = vmatpush1.msra.mxu0 0.0
    %508 = vmatprep.subr.mxu0 0.0
    %509 = vmatpush1.msra.mxu0 0.0
    %510 = vmatprep.subr.mxu0 0.0
    %511 = vmatpush1.msra.mxu0 0.0
    %512 = vmatprep.subr.mxu0 0.0
    %513 = vmatpush1.msra.mxu0 %v72
    %514 = vmatprep.subr.mxu0 0.0
    %515 = vmatpush1.msra.mxu0 %v71
    %516 = vmatprep.subr.mxu0 0.0
    %517 = vmatpush1.msra.mxu0 %v70
    %518 = vmatprep.subr.mxu0 0.0
    %519 = vmatpush1.msra.mxu0 %v69
    %520 = vmatprep.subr.mxu0 0.0
    %521 = vmatpush2.msra.mxu0 0.0
    %522 = vmatprep.subr.mxu0 0.0
    %523 = vmatpush2.msra.mxu0 0.0
    %524 = vmatprep.subr.mxu0 0.0
    %525 = vmatpush2.msra.mxu0 0.0
    %526 = vmatprep.subr.mxu0 0.0
    %527 = vmatpush2.msra.mxu0 0.0
    %528 = vmatprep.subr.mxu0 0.0
    %529 = vmatpush2.msra.mxu0 0.0
    %530 = vmatprep.subr.mxu0 0.0
    %531 = vmatpush2.msra.mxu0 0.0
    %532 = vmatprep.subr.mxu0 0.0
    %533 = vmatpush2.msra.mxu0 0.0
    %534 = vmatprep.subr.mxu0 0.0
    %535 = vmatpush2.msra.mxu0 0.0
    %536 = vmatprep.subr.mxu0 0.0
    %537 = vmatpush2.msra.mxu0 0.0
    %538 = vmatprep.subr.mxu0 0.0
    %539 = vmatpush2.msra.mxu0 0.0
    %540 = vmatprep.subr.mxu0 0.0
    %541 = vmatpush2.msra.mxu0 0.0
    %542 = vmatprep.subr.mxu0 0.0
    %543 = vmatpush2.msra.mxu0 0.0
    %544 = vmatprep.subr.mxu0 0.0
    %545 = vmatpush2.msra.mxu0 0.0
    %546 = vmatprep.subr.mxu0 0.0
    %547 = vmatpush2.msra.mxu0 0.0
    %548 = vmatprep.subr.mxu0 0.0
    %549 = vmatpush2.msra.mxu0 0.0
    %550 = vmatprep.subr.mxu0 0.0
    %551 = vmatpush2.msra.mxu0 0.0
    %552 = vmatprep.mubr.f32.mxu0 0.0
    %553 = vmatmul.mubr.f32.gmra.mxu0 %v483
    %v554 = vpop.f32.mrf.mxu0
    %v555 = vadd.f32 %v190, %v554
    %v556 = vpop.f32.mrf.mxu0
    %557 = vmatprep.mubr.f32.mxu0 0.0
    %558 = vmatmul.mubr.f32.gmra.mxu0 %v486
    %v559 = vpop.f32.mrf.mxu0
    %v560 = vadd.f32 %v190, %v559
    %v561 = vpop.f32.mrf.mxu0
    %562 = vdwg.mxu0
    %v563 = vmax.f32 %v555, 0.0
    %v564 = vmax.f32 %v560, 0.0
    %v566 = vsel %vm191, %v563, 0
    %v569 = vsel %vm191, %v564, 0
    %571 = vmatprep.subr.mxu0 0.0
    %572 = vmatpush1.msra.mxu0 0.0
    %573 = vmatprep.subr.mxu0 0.0
    %574 = vmatpush1.msra.mxu0 0.0
    %575 = vmatprep.subr.mxu0 0.0
    %576 = vmatpush1.msra.mxu0 0.0
    %577 = vmatprep.subr.mxu0 0.0
    %578 = vmatpush1.msra.mxu0 0.0
    %579 = vmatprep.subr.mxu0 0.0
    %580 = vmatpush1.msra.mxu0 0.0
    %581 = vmatprep.subr.mxu0 0.0
    %582 = vmatpush1.msra.mxu0 0.0
    %583 = vmatprep.subr.mxu0 0.0
    %584 = vmatpush1.msra.mxu0 0.0
    %585 = vmatprep.subr.mxu0 0.0
    %586 = vmatpush1.msra.mxu0 0.0
    %587 = vmatprep.subr.mxu0 0.0
    %588 = vmatpush1.msra.mxu0 0.0
    %589 = vmatprep.subr.mxu0 0.0
    %590 = vmatpush1.msra.mxu0 0.0
    %591 = vmatprep.subr.mxu0 0.0
    %592 = vmatpush1.msra.mxu0 0.0
    %593 = vmatprep.subr.mxu0 0.0
    %594 = vmatpush1.msra.mxu0 0.0
    %595 = vmatprep.subr.mxu0 0.0
    %596 = vmatpush1.msra.mxu0 %v76
    %597 = vmatprep.subr.mxu0 0.0
    %598 = vmatpush1.msra.mxu0 %v75
    %599 = vmatprep.subr.mxu0 0.0
    %600 = vmatpush1.msra.mxu0 %v74
    %601 = vmatprep.subr.mxu0 0.0
    %602 = vmatpush1.msra.mxu0 %v73
    %603 = vmatprep.subr.mxu0 0.0
    %604 = vmatpush2.msra.mxu0 0.0
    %605 = vmatprep.subr.mxu0 0.0
    %606 = vmatpush2.msra.mxu0 0.0
    %607 = vmatprep.subr.mxu0 0.0
    %608 = vmatpush2.msra.mxu0 0.0
    %609 = vmatprep.subr.mxu0 0.0
    %610 = vmatpush2.msra.mxu0 0.0
    %611 = vmatprep.subr.mxu0 0.0
    %612 = vmatpush2.msra.mxu0 0.0
    %613 = vmatprep.subr.mxu0 0.0
    %614 = vmatpush2.msra.mxu0 0.0
    %615 = vmatprep.subr.mxu0 0.0
    %616 = vmatpush2.msra.mxu0 0.0
    %617 = vmatprep.subr.mxu0 0.0
    %618 = vmatpush2.msra.mxu0 0.0
    %619 = vmatprep.subr.mxu0 0.0
    %620 = vmatpush2.msra.mxu0 0.0
    %621 = vmatprep.subr.mxu0 0.0
    %622 = vmatpush2.msra.mxu0 0.0
    %623 = vmatprep.subr.mxu0 0.0
    %624 = vmatpush2.msra.mxu0 0.0
    %625 = vmatprep.subr.mxu0 0.0
    %626 = vmatpush2.msra.mxu0 0.0
    %627 = vmatprep.subr.mxu0 0.0
    %628 = vmatpush2.msra.mxu0 0.0
    %629 = vmatprep.subr.mxu0 0.0
    %630 = vmatpush2.msra.mxu0 0.0
    %631 = vmatprep.subr.mxu0 0.0
    %632 = vmatpush2.msra.mxu0 0.0
    %633 = vmatprep.subr.mxu0 0.0
    %634 = vmatpush2.msra.mxu0 0.0
    %635 = vmatprep.mubr.f32.mxu0 0.0
    %636 = vmatmul.mubr.f32.gmra.mxu0 %v566
    %v637 = vpop.f32.mrf.mxu0
    %v638 = vadd.f32 %v296, %v637
    %v639 = vpop.f32.mrf.mxu0
    %640 = vmatprep.mubr.f32.mxu0 0.0
    %641 = vmatmul.mubr.f32.gmra.mxu0 %v569
    %v642 = vpop.f32.mrf.mxu0
    %v643 = vadd.f32 %v296, %v642
    %v644 = vpop.f32.mrf.mxu0
    %645 = vdwg.mxu0
    %646 = vst [vmem:[%s3] sm:$0xff] %v376
    %647 = vst [vmem:[%s3 + $0x8] sm:$0xff] %v381
    %648 = vst [vmem:[%s3 + $0x18] sm:$0xff] %v386
    %649 = vst [vmem:[%s3 + $0x20] sm:$0xff] %v391
    %650 = vst [vmem:[%s3 + $0x10] sm:$0xff] %v638
    %651 = vst [vmem:[%s3 + $0x28] sm:$0xff] %v643
    // Predicated region
    $region26: #{nlvl_forward.1} parent=1 // pred_check
      _
    $region27: #{nlvl_forward.1} parent=1 // pred_check_branch
      %653 = sbr.rel (0) target = $region29
    $region28: #{nlvl_forward.1} parent=1 // pred_region
      _
    $region29: #{nlvl_forward.1} parent=1 // pred_fallthru
      _
    // Predicated region
    $region30: #{nlvl_forward.1} parent=1 // pred_check
      _
    $region31: #{nlvl_forward.1} parent=1 // pred_check_branch
      %655 = sbr.rel (0) target = $region33
    $region32: #{nlvl_forward.1} parent=1 // pred_region
      _
    $region33: #{nlvl_forward.1} parent=1 // pred_fallthru
      _
    %656 = vsyncpa [#allocation3], 1
    %657 = vsyncpa [#allocation5], 1

</llo_original>
